<compile_context>
chip_gen: v7x
topology: tpu7x:2x2x1
jax: 0.10.0
libtpu: 0.0.40
codegen_flags: <defaults>
</compile_context>

<pallas_src>
import jax
import jax.numpy as jnp
from jax import lax
from jax.experimental import pallas as pl
from jax.experimental.pallas import tpu as pltpu


def _bilstm_kernel(maxlen_ref,             # SMEM (1,)  int32
                   lens_ref,               # VMEM [B, 1] int32
                   gxf_ref, gxr_ref,       # VMEM [T, B, 4H] bf16  (x@Wih + b)
                   whhf_ref, whhr_ref,     # VMEM [H, 4H] bf16
                   out_ref,                # VMEM [T, B, H] bf16  (fwd + rev sum)
                   hn_ref, cn_ref,         # VMEM [2, B, H] f32
                   rev_buf):               # scratch VMEM [T, B, H] bf16
    T, B, H = out_ref.shape
    # Clamp so dynamic out_ref[s] / gxf_ref[s] stores can never go OOB.
    max_len = jnp.minimum(maxlen_ref[0], T)
    lens = lens_ref[...]                   # [B, 1] int32

    def sigmoid(x):
        # Exactly one EUP transcendental per gate.
        return 0.5 * jnp.tanh(0.5 * x) + 0.5

    def lstm_cell(gates_x, h, c, whh_ref):
        # bf16 MXU matmul, f32 accumulation; gate order (i, f, g, o).
        # NOTE: weight ref is indexed *inside* the loop (not hoisted to SSA)
        # to avoid pinning ~64 vregs of loop-invariant data across the loop.
        gates = gates_x.astype(jnp.float32) + jnp.dot(
            h.astype(jnp.bfloat16), whh_ref[...],
            preferred_element_type=jnp.float32)
        i = sigmoid(gates[:, 0 * H:1 * H])
        f = sigmoid(gates[:, 1 * H:2 * H])
        g = jnp.tanh(gates[:, 2 * H:3 * H])
        o = sigmoid(gates[:, 3 * H:4 * H])
        c_new = f * c + i * g
        h_new = o * jnp.tanh(c_new)
        return h_new, c_new

    def body(s, carry):
        hf, cf, hr, cr = carry
        t_r = max_len - 1 - s

        # -------- forward direction @ t = s --------
        hf_new, cf_new = lstm_cell(gxf_ref[s], hf, cf, whhf_ref)
        m_f = s < lens                                   # [B, 1]
        hf = jnp.where(m_f, hf_new, hf)
        cf = jnp.where(m_f, cf_new, cf)
        out_ref[s] = jnp.where(m_f, hf_new, 0.0).astype(out_ref.dtype)

        # -------- reverse direction @ t = max_len-1-s (independent chain) ---
        hr_new, cr_new = lstm_cell(gxr_ref[t_r], hr, cr, whhr_ref)
        m_r = t_r < lens
        hr = jnp.where(m_r, hr_new, hr)
        cr = jnp.where(m_r, cr_new, cr)
        rev_buf[t_r] = jnp.where(m_r, hr_new, 0.0).astype(rev_buf.dtype)

        return hf, cf, hr, cr

    z = jnp.zeros((B, H), jnp.float32)
    hf, cf, hr, cr = lax.fori_loop(0, max_len, body, (z, z, z, z))

    # Single fused pass: bidirectional sum for t < max_len, zeros for the
    # never-visited padded tail t in [max_len, T) (pad_packed_sequence
    # semantics) -- replaces two zero-init sweeps + a separate add sweep.
    t_ids = lax.broadcasted_iota(jnp.int32, (T, 1, 1), 0)
    summed = out_ref[...].astype(jnp.float32) + rev_buf[...].astype(jnp.float32)
    out_ref[...] = jnp.where(t_ids < max_len, summed, 0.0).astype(out_ref.dtype)

    # Final hidden / cell states, PyTorch layout [num_directions, B, H].
    hn_ref[0] = hf
    hn_ref[1] = hr
    cn_ref[0] = cf
    cn_ref[1] = cr


def encoder_forward(sorted_seqs, sorted_len, orig_idx, params):
    """Pallas equivalent of Encoder.forward (lstm, nlayers=1, bidirectional).

    sorted_seqs: [T, B, E] float32 embedded inputs (time-major, sorted by
    descending length, as required by pack_padded_sequence).
    Returns (outputs [T, B, H], (h_n [2, B, H], c_n [2, B, H]))."""
    T, B, E = sorted_seqs.shape
    H = params["whh_f"].shape[1]
    f32, bf16 = jnp.float32, jnp.bfloat16

    lens = sorted_len.astype(jnp.int32).reshape(B, 1)
    max_len = sorted_len.astype(jnp.int32)[:1]           # sorted desc -> lens[0]

    # ---- hoisted input projection: one big MXU matmul per direction (XLA).
    # Result is stored bf16 (streamed into the kernel); accumulation is f32.
    x_b = sorted_seqs.astype(bf16)

    def in_proj(wih, bih, bhh):
        w = wih.T.astype(bf16)                           # [E, 4H]
        b = (bih + bhh).astype(f32)                      # [4H]
        return (jnp.dot(x_b, w, preferred_element_type=f32) + b).astype(bf16)

    gx_f = in_proj(params["wih_f"], params["bih_f"], params["bhh_f"])  # [T,B,4H]
    gx_r = in_proj(params["wih_r"], params["bih_r"], params["bhh_r"])

    whh_f = params["whh_f"].T.astype(bf16)               # [H, 4H]
    whh_r = params["whh_r"].T.astype(bf16)

    vmem = pltpu.MemorySpace.VMEM
    smem = pltpu.MemorySpace.SMEM

    out_sum, h_n, c_n = pl.pallas_call(
        _bilstm_kernel,
        out_shape=(jax.ShapeDtypeStruct((T, B, H), bf16),
                   jax.ShapeDtypeStruct((2, B, H), f32),
                   jax.ShapeDtypeStruct((2, B, H), f32)),
        # No grid: single invocation, full arrays resident once in VMEM
        # (no 2-deep auto-pipeline buffering of the big activations/weights).
        in_specs=[
            pl.BlockSpec(memory_space=smem),   # max_len (1,)
            pl.BlockSpec(memory_space=vmem),   # lens   [B, 1]
            pl.BlockSpec(memory_space=vmem),   # gx_f   [T, B, 4H] bf16
            pl.BlockSpec(memory_space=vmem),   # gx_r   [T, B, 4H] bf16
            pl.BlockSpec(memory_space=vmem),   # whh_f  [H, 4H] bf16
            pl.BlockSpec(memory_space=vmem),   # whh_r  [H, 4H] bf16
        ],
        out_specs=(
            pl.BlockSpec(memory_space=vmem),
            pl.BlockSpec(memory_space=vmem),
            pl.BlockSpec(memory_space=vmem),
        ),
        scratch_shapes=[pltpu.VMEM((T, B, H), bf16)],
    )(max_len, lens, gx_f, gx_r, whh_f, whh_r)

    # glue: restore original batch order (index_select along batch axis).
    outputs = out_sum[:, orig_idx, :].astype(f32)
    return outputs, (h_n, c_n)


# ---------------- deterministic parameter init (PyTorch nn.LSTM style) -----
def init_params(key, E, H):
    k = 1.0 / float(H) ** 0.5
    names = ["wih_f", "whh_f", "bih_f", "bhh_f",
             "wih_r", "whh_r", "bih_r", "bhh_r"]
    shapes = [(4 * H, E), (4 * H, H), (4 * H,), (4 * H,),
              (4 * H, E), (4 * H, H), (4 * H,), (4 * H,)]
    keys = jax.random.split(key, len(names))
    return {n: jax.random.uniform(kk, s, jnp.float32, -k, k)
            for n, s, kk in zip(names, shapes, keys)}


# ---------------- pure-JAX f32 reference for correctness check -------------
def _ref_direction(x, lens, wih, whh, b, reverse):
    T, B, _ = x.shape
    H = whh.shape[1]
    h = jnp.zeros((B, H), jnp.float32)
    c = jnp.zeros((B, H), jnp.float32)
    outs = [None] * T
    order = range(T - 1, -1, -1) if reverse else range(T)
    for t in order:
        gates = x[t] @ wih.T + h @ whh.T + b
        i = jax.nn.sigmoid(gates[:, :H])
        f = jax.nn.sigmoid(gates[:, H:2 * H])
        g = jnp.tanh(gates[:, 2 * H:3 * H])
        o = jax.nn.sigmoid(gates[:, 3 * H:])
        c_new = f * c + i * g
        h_new = o * jnp.tanh(c_new)
        m = (t < lens)[:, None]
        h = jnp.where(m, h_new, h)
        c = jnp.where(m, c_new, c)
        outs[t] = jnp.where(m, h_new, 0.0)
    return jnp.stack(outs, 0), h, c


def encoder_ref(x, lens, orig_idx, p):
    bf = p["bih_f"] + p["bhh_f"]
    br = p["bih_r"] + p["bhh_r"]
    of, hf, cf = _ref_direction(x, lens, p["wih_f"], p["whh_f"], bf, False)
    orv, hr, cr = _ref_direction(x, lens, p["wih_r"], p["whh_r"], br, True)
    out = (of + orv)[:, orig_idx, :]
    return out, (jnp.stack([hf, hr], 0), jnp.stack([cf, cr], 0))


if __name__ == "__main__":
    # Small but lane/sublane-friendly shapes: B=8 fills sublanes, H=128 gives
    # lane-dense (unmasked) output stores.
    T, B, E, H = 12, 8, 64, 128
    key = jax.random.PRNGKey(0)
    k_x, k_p = jax.random.split(key)

    sorted_seqs = jax.random.normal(k_x, (T, B, E), jnp.float32)   # embedded
    sorted_len = jnp.array([11, 10, 9, 8, 7, 5, 3, 2], jnp.int32)  # desc (pack)
    orig_idx = jnp.array([3, 6, 0, 5, 2, 7, 1, 4], jnp.int32)      # undo-sort
    params = init_params(k_p, E, H)

    outputs, (h_n, c_n) = encoder_forward(sorted_seqs, sorted_len, orig_idx,
                                          params)
    jax.block_until_ready((outputs, h_n, c_n))

    ref_out, (ref_h, ref_c) = encoder_ref(sorted_seqs, sorted_len, orig_idx,
                                          params)
    assert outputs.shape == (T, B, H)
    assert h_n.shape == (2, B, H) and c_n.shape == (2, B, H)
    # bf16 matmul inputs + bf16 activation/output storage (f32 state and gate
    # accumulation) vs pure-f32 reference.
    assert jnp.allclose(outputs, ref_out, atol=4e-2, rtol=4e-2)
    assert jnp.allclose(h_n, ref_h, atol=3e-2, rtol=3e-2)
    assert jnp.allclose(c_n, ref_c, atol=3e-2, rtol=3e-2)

    print("KERNEL_OK")
</pallas_src>

<mosaic_0001>
module attributes {stable_mosaic.version = 11 : i64} {
  func.func @_bilstm_kernel(%arg0: memref<1xi32, #tpu.memory_space<smem>>, %arg1: memref<8x1xi32, #tpu.memory_space<vmem>>, %arg2: memref<12x8x512xbf16, #tpu.memory_space<vmem>>, %arg3: memref<12x8x512xbf16, #tpu.memory_space<vmem>>, %arg4: memref<128x512xbf16, #tpu.memory_space<vmem>>, %arg5: memref<128x512xbf16, #tpu.memory_space<vmem>>, %arg6: memref<12x8x128xbf16, #tpu.memory_space<vmem>>, %arg7: memref<2x8x128xf32, #tpu.memory_space<vmem>>, %arg8: memref<2x8x128xf32, #tpu.memory_space<vmem>>, %arg9: memref<12x8x128xbf16, #tpu.memory_space<vmem>>) attributes {dimension_semantics = [], scalar_prefetch = 0 : i64, scratch_operands = 1 : i64, tpu.core_type = #tpu.core_type<tc>} {
    %c0 = arith.constant 0 : index
    %0 = memref.load %arg0[%c0] : memref<1xi32, #tpu.memory_space<smem>>
    %c12_i32 = arith.constant 12 : i32
    %1 = arith.minsi %0, %c12_i32 : i32
    %c0_0 = arith.constant 0 : index
    %c0_1 = arith.constant 0 : index
    %2 = vector.load %arg1[%c0_0, %c0_1] : memref<8x1xi32, #tpu.memory_space<vmem>>, vector<8x1xi32>
    %cst = arith.constant 0.000000e+00 : f32
    %3 = vector.broadcast %cst : f32 to vector<8x128xf32>
    %c0_i32 = arith.constant 0 : i32
    %4 = arith.subi %1, %c0_i32 : i32
    %5 = arith.addi %c0_i32, %4 : i32
    %c1_i32 = arith.constant 1 : i32
    %6:4 = scf.for %arg10 = %c0_i32 to %5 step %c1_i32 iter_args(%arg11 = %3, %arg12 = %3, %arg13 = %3, %arg14 = %3) -> (vector<8x128xf32>, vector<8x128xf32>, vector<8x128xf32>, vector<8x128xf32>)  : i32 {
      %c1_i32_23 = arith.constant 1 : i32
      %33 = arith.subi %1, %c1_i32_23 : i32
      %34 = arith.subi %33, %arg10 : i32
      %35 = arith.index_cast %arg10 : i32 to index
      %c0_24 = arith.constant 0 : index
      %c0_25 = arith.constant 0 : index
      %36 = vector.load %arg2[%35, %c0_24, %c0_25] : memref<12x8x512xbf16, #tpu.memory_space<vmem>>, vector<1x8x512xbf16>
      %37 = vector.shape_cast %36 : vector<1x8x512xbf16> to vector<8x512xbf16>
      %38 = arith.extf %37 : vector<8x512xbf16> to vector<8x512xf32>
      %39 = arith.truncf %arg11 : vector<8x128xf32> to vector<8x128xbf16>
      %c0_26 = arith.constant 0 : index
      %c0_27 = arith.constant 0 : index
      %40 = vector.load %arg4[%c0_26, %c0_27] : memref<128x512xbf16, #tpu.memory_space<vmem>>, vector<128x512xbf16>
      %cst_28 = arith.constant dense<0.000000e+00> : vector<8x512xf32>
      %41 = tpu.matmul %39, %40, %cst_28 {dimension_numbers = #tpu.dot_dimension_numbers<[1], [0], [0], [1], [0, 0, 1, 1], [], []>} : vector<8x128xbf16>, vector<128x512xbf16>, vector<8x512xf32> -> vector<8x512xf32>
      %42 = arith.addf %38, %41 : vector<8x512xf32>
      %43 = vector.extract_strided_slice %42 {offsets = [0, 0], sizes = [8, 128], strides = [1, 1]} : vector<8x512xf32> to vector<8x128xf32>
      %cst_29 = arith.constant 5.000000e-01 : f32
      %44 = vector.broadcast %cst_29 : f32 to vector<8x128xf32>
      %45 = arith.mulf %44, %43 : vector<8x128xf32>
      %46 = math.tanh %45 : vector<8x128xf32>
      %cst_30 = arith.constant 5.000000e-01 : f32
      %47 = vector.broadcast %cst_30 : f32 to vector<8x128xf32>
      %48 = arith.mulf %47, %46 : vector<8x128xf32>
      %cst_31 = arith.constant 5.000000e-01 : f32
      %49 = vector.broadcast %cst_31 : f32 to vector<8x128xf32>
      %50 = arith.addf %48, %49 : vector<8x128xf32>
      %51 = vector.extract_strided_slice %42 {offsets = [0, 128], sizes = [8, 128], strides = [1, 1]} : vector<8x512xf32> to vector<8x128xf32>
      %cst_32 = arith.constant 5.000000e-01 : f32
      %52 = vector.broadcast %cst_32 : f32 to vector<8x128xf32>
      %53 = arith.mulf %52, %51 : vector<8x128xf32>
      %54 = math.tanh %53 : vector<8x128xf32>
      %cst_33 = arith.constant 5.000000e-01 : f32
      %55 = vector.broadcast %cst_33 : f32 to vector<8x128xf32>
      %56 = arith.mulf %55, %54 : vector<8x128xf32>
      %cst_34 = arith.constant 5.000000e-01 : f32
      %57 = vector.broadcast %cst_34 : f32 to vector<8x128xf32>
      %58 = arith.addf %56, %57 : vector<8x128xf32>
      %59 = vector.extract_strided_slice %42 {offsets = [0, 256], sizes = [8, 128], strides = [1, 1]} : vector<8x512xf32> to vector<8x128xf32>
      %60 = math.tanh %59 : vector<8x128xf32>
      %61 = vector.extract_strided_slice %42 {offsets = [0, 384], sizes = [8, 128], strides = [1, 1]} : vector<8x512xf32> to vector<8x128xf32>
      %cst_35 = arith.constant 5.000000e-01 : f32
      %62 = vector.broadcast %cst_35 : f32 to vector<8x128xf32>
      %63 = arith.mulf %62, %61 : vector<8x128xf32>
      %64 = math.tanh %63 : vector<8x128xf32>
      %cst_36 = arith.constant 5.000000e-01 : f32
      %65 = vector.broadcast %cst_36 : f32 to vector<8x128xf32>
      %66 = arith.mulf %65, %64 : vector<8x128xf32>
      %cst_37 = arith.constant 5.000000e-01 : f32
      %67 = vector.broadcast %cst_37 : f32 to vector<8x128xf32>
      %68 = arith.addf %66, %67 : vector<8x128xf32>
      %69 = arith.mulf %58, %arg12 : vector<8x128xf32>
      %70 = arith.mulf %50, %60 : vector<8x128xf32>
      %71 = arith.addf %69, %70 : vector<8x128xf32>
      %72 = math.tanh %71 : vector<8x128xf32>
      %73 = arith.mulf %68, %72 : vector<8x128xf32>
      %74 = vector.broadcast %arg10 : i32 to vector<8x1xi32>
      %75 = arith.cmpi slt, %74, %2 : vector<8x1xi32>
      %76 = vector.shape_cast %75 : vector<8x1xi1> to vector<8x1xi1>
      %77 = vector.broadcast %76 : vector<8x1xi1> to vector<8x128xi1>
      %78 = arith.select %77, %73, %arg11 : vector<8x128xi1>, vector<8x128xf32>
      %79 = vector.shape_cast %75 : vector<8x1xi1> to vector<8x1xi1>
      %80 = vector.broadcast %79 : vector<8x1xi1> to vector<8x128xi1>
      %81 = arith.select %80, %71, %arg12 : vector<8x128xi1>, vector<8x128xf32>
      %cst_38 = arith.constant 0.000000e+00 : f32
      %82 = vector.shape_cast %75 : vector<8x1xi1> to vector<8x1xi1>
      %83 = vector.broadcast %82 : vector<8x1xi1> to vector<8x128xi1>
      %84 = vector.broadcast %cst_38 : f32 to vector<8x128xf32>
      %85 = arith.select %83, %73, %84 : vector<8x128xi1>, vector<8x128xf32>
      %86 = arith.truncf %85 : vector<8x128xf32> to vector<8x128xbf16>
      %87 = arith.index_cast %arg10 : i32 to index
      %c0_39 = arith.constant 0 : index
      %c0_40 = arith.constant 0 : index
      %88 = vector.load %arg6[%87, %c0_39, %c0_40] : memref<12x8x128xbf16, #tpu.memory_space<vmem>>, vector<1x8x128xbf16>
      %89 = vector.shape_cast %88 : vector<1x8x128xbf16> to vector<8x128xbf16>
      %90 = vector.shape_cast %86 : vector<8x128xbf16> to vector<1x8x128xbf16>
      tpu.vector_store %arg6[%87, %c0_39, %c0_40], %90 {strides = array<i32>} : memref<12x8x128xbf16, #tpu.memory_space<vmem>>, vector<1x8x128xbf16>,
      %91 = arith.index_cast %34 : i32 to index
      %c0_41 = arith.constant 0 : index
      %c0_42 = arith.constant 0 : index
      %92 = vector.load %arg3[%91, %c0_41, %c0_42] : memref<12x8x512xbf16, #tpu.memory_space<vmem>>, vector<1x8x512xbf16>
      %93 = vector.shape_cast %92 : vector<1x8x512xbf16> to vector<8x512xbf16>
      %94 = arith.extf %93 : vector<8x512xbf16> to vector<8x512xf32>
      %95 = arith.truncf %arg13 : vector<8x128xf32> to vector<8x128xbf16>
      %c0_43 = arith.constant 0 : index
      %c0_44 = arith.constant 0 : index
      %96 = vector.load %arg5[%c0_43, %c0_44] : memref<128x512xbf16, #tpu.memory_space<vmem>>, vector<128x512xbf16>
      %cst_45 = arith.constant dense<0.000000e+00> : vector<8x512xf32>
      %97 = tpu.matmul %95, %96, %cst_45 {dimension_numbers = #tpu.dot_dimension_numbers<[1], [0], [0], [1], [0, 0, 1, 1], [], []>} : vector<8x128xbf16>, vector<128x512xbf16>, vector<8x512xf32> -> vector<8x512xf32>
      %98 = arith.addf %94, %97 : vector<8x512xf32>
      %99 = vector.extract_strided_slice %98 {offsets = [0, 0], sizes = [8, 128], strides = [1, 1]} : vector<8x512xf32> to vector<8x128xf32>
      %cst_46 = arith.constant 5.000000e-01 : f32
      %100 = vector.broadcast %cst_46 : f32 to vector<8x128xf32>
      %101 = arith.mulf %100, %99 : vector<8x128xf32>
      %102 = math.tanh %101 : vector<8x128xf32>
      %cst_47 = arith.constant 5.000000e-01 : f32
      %103 = vector.broadcast %cst_47 : f32 to vector<8x128xf32>
      %104 = arith.mulf %103, %102 : vector<8x128xf32>
      %cst_48 = arith.constant 5.000000e-01 : f32
      %105 = vector.broadcast %cst_48 : f32 to vector<8x128xf32>
      %106 = arith.addf %104, %105 : vector<8x128xf32>
      %107 = vector.extract_strided_slice %98 {offsets = [0, 128], sizes = [8, 128], strides = [1, 1]} : vector<8x512xf32> to vector<8x128xf32>
      %cst_49 = arith.constant 5.000000e-01 : f32
      %108 = vector.broadcast %cst_49 : f32 to vector<8x128xf32>
      %109 = arith.mulf %108, %107 : vector<8x128xf32>
      %110 = math.tanh %109 : vector<8x128xf32>
      %cst_50 = arith.constant 5.000000e-01 : f32
      %111 = vector.broadcast %cst_50 : f32 to vector<8x128xf32>
      %112 = arith.mulf %111, %110 : vector<8x128xf32>
      %cst_51 = arith.constant 5.000000e-01 : f32
      %113 = vector.broadcast %cst_51 : f32 to vector<8x128xf32>
      %114 = arith.addf %112, %113 : vector<8x128xf32>
      %115 = vector.extract_strided_slice %98 {offsets = [0, 256], sizes = [8, 128], strides = [1, 1]} : vector<8x512xf32> to vector<8x128xf32>
      %116 = math.tanh %115 : vector<8x128xf32>
      %117 = vector.extract_strided_slice %98 {offsets = [0, 384], sizes = [8, 128], strides = [1, 1]} : vector<8x512xf32> to vector<8x128xf32>
      %cst_52 = arith.constant 5.000000e-01 : f32
      %118 = vector.broadcast %cst_52 : f32 to vector<8x128xf32>
      %119 = arith.mulf %118, %117 : vector<8x128xf32>
      %120 = math.tanh %119 : vector<8x128xf32>
      %cst_53 = arith.constant 5.000000e-01 : f32
      %121 = vector.broadcast %cst_53 : f32 to vector<8x128xf32>
      %122 = arith.mulf %121, %120 : vector<8x128xf32>
      %cst_54 = arith.constant 5.000000e-01 : f32
      %123 = vector.broadcast %cst_54 : f32 to vector<8x128xf32>
      %124 = arith.addf %122, %123 : vector<8x128xf32>
      %125 = arith.mulf %114, %arg14 : vector<8x128xf32>
      %126 = arith.mulf %106, %116 : vector<8x128xf32>
      %127 = arith.addf %125, %126 : vector<8x128xf32>
      %128 = math.tanh %127 : vector<8x128xf32>
      %129 = arith.mulf %124, %128 : vector<8x128xf32>
      %130 = vector.broadcast %34 : i32 to vector<8x1xi32>
      %131 = arith.cmpi slt, %130, %2 : vector<8x1xi32>
      %132 = vector.shape_cast %131 : vector<8x1xi1> to vector<8x1xi1>
      %133 = vector.broadcast %132 : vector<8x1xi1> to vector<8x128xi1>
      %134 = arith.select %133, %129, %arg13 : vector<8x128xi1>, vector<8x128xf32>
      %135 = vector.shape_cast %131 : vector<8x1xi1> to vector<8x1xi1>
      %136 = vector.broadcast %135 : vector<8x1xi1> to vector<8x128xi1>
      %137 = arith.select %136, %127, %arg14 : vector<8x128xi1>, vector<8x128xf32>
      %cst_55 = arith.constant 0.000000e+00 : f32
      %138 = vector.shape_cast %131 : vector<8x1xi1> to vector<8x1xi1>
      %139 = vector.broadcast %138 : vector<8x1xi1> to vector<8x128xi1>
      %140 = vector.broadcast %cst_55 : f32 to vector<8x128xf32>
      %141 = arith.select %139, %129, %140 : vector<8x128xi1>, vector<8x128xf32>
      %142 = arith.truncf %141 : vector<8x128xf32> to vector<8x128xbf16>
      %143 = arith.index_cast %34 : i32 to index
      %c0_56 = arith.constant 0 : index
      %c0_57 = arith.constant 0 : index
      %144 = vector.load %arg9[%143, %c0_56, %c0_57] : memref<12x8x128xbf16, #tpu.memory_space<vmem>>, vector<1x8x128xbf16>
      %145 = vector.shape_cast %144 : vector<1x8x128xbf16> to vector<8x128xbf16>
      %146 = vector.shape_cast %142 : vector<8x128xbf16> to vector<1x8x128xbf16>
      tpu.vector_store %arg9[%143, %c0_56, %c0_57], %146 {strides = array<i32>} : memref<12x8x128xbf16, #tpu.memory_space<vmem>>, vector<1x8x128xbf16>,
      scf.yield %78, %81, %134, %137 : vector<8x128xf32>, vector<8x128xf32>, vector<8x128xf32>, vector<8x128xf32>
    }
    %7 = tpu.iota {dimensions = array<i32: 0>} : vector<12x1x1xi32>
    %c0_2 = arith.constant 0 : index
    %c0_3 = arith.constant 0 : index
    %c0_4 = arith.constant 0 : index
    %8 = vector.load %arg6[%c0_2, %c0_3, %c0_4] : memref<12x8x128xbf16, #tpu.memory_space<vmem>>, vector<12x8x128xbf16>
    %9 = arith.extf %8 : vector<12x8x128xbf16> to vector<12x8x128xf32>
    %c0_5 = arith.constant 0 : index
    %c0_6 = arith.constant 0 : index
    %c0_7 = arith.constant 0 : index
    %10 = vector.load %arg9[%c0_5, %c0_6, %c0_7] : memref<12x8x128xbf16, #tpu.memory_space<vmem>>, vector<12x8x128xbf16>
    %11 = arith.extf %10 : vector<12x8x128xbf16> to vector<12x8x128xf32>
    %12 = arith.addf %9, %11 : vector<12x8x128xf32>
    %13 = vector.broadcast %1 : i32 to vector<12x1x1xi32>
    %14 = arith.cmpi slt, %7, %13 : vector<12x1x1xi32>
    %cst_8 = arith.constant 0.000000e+00 : f32
    %15 = vector.shape_cast %14 : vector<12x1x1xi1> to vector<12x1x1xi1>
    %16 = vector.broadcast %15 : vector<12x1x1xi1> to vector<12x8x128xi1>
    %17 = vector.broadcast %cst_8 : f32 to vector<12x8x128xf32>
    %18 = arith.select %16, %12, %17 : vector<12x8x128xi1>, vector<12x8x128xf32>
    %19 = arith.truncf %18 : vector<12x8x128xf32> to vector<12x8x128xbf16>
    %c0_9 = arith.constant 0 : index
    %c0_10 = arith.constant 0 : index
    %c0_11 = arith.constant 0 : index
    %20 = vector.load %arg6[%c0_9, %c0_10, %c0_11] : memref<12x8x128xbf16, #tpu.memory_space<vmem>>, vector<12x8x128xbf16>
    tpu.vector_store %arg6[%c0_9, %c0_10, %c0_11], %19 {strides = array<i32>} : memref<12x8x128xbf16, #tpu.memory_space<vmem>>, vector<12x8x128xbf16>,
    %c0_12 = arith.constant 0 : index
    %c0_13 = arith.constant 0 : index
    %c0_14 = arith.constant 0 : index
    %21 = vector.load %arg7[%c0_12, %c0_13, %c0_14] : memref<2x8x128xf32, #tpu.memory_space<vmem>>, vector<1x8x128xf32>
    %22 = vector.shape_cast %21 : vector<1x8x128xf32> to vector<8x128xf32>
    %23 = vector.shape_cast %6#0 : vector<8x128xf32> to vector<1x8x128xf32>
    tpu.vector_store %arg7[%c0_12, %c0_13, %c0_14], %23 {strides = array<i32>} : memref<2x8x128xf32, #tpu.memory_space<vmem>>, vector<1x8x128xf32>,
    %c1 = arith.constant 1 : index
    %c0_15 = arith.constant 0 : index
    %c0_16 = arith.constant 0 : index
    %24 = vector.load %arg7[%c1, %c0_15, %c0_16] : memref<2x8x128xf32, #tpu.memory_space<vmem>>, vector<1x8x128xf32>
    %25 = vector.shape_cast %24 : vector<1x8x128xf32> to vector<8x128xf32>
    %26 = vector.shape_cast %6#2 : vector<8x128xf32> to vector<1x8x128xf32>
    tpu.vector_store %arg7[%c1, %c0_15, %c0_16], %26 {strides = array<i32>} : memref<2x8x128xf32, #tpu.memory_space<vmem>>, vector<1x8x128xf32>,
    %c0_17 = arith.constant 0 : index
    %c0_18 = arith.constant 0 : index
    %c0_19 = arith.constant 0 : index
    %27 = vector.load %arg8[%c0_17, %c0_18, %c0_19] : memref<2x8x128xf32, #tpu.memory_space<vmem>>, vector<1x8x128xf32>
    %28 = vector.shape_cast %27 : vector<1x8x128xf32> to vector<8x128xf32>
    %29 = vector.shape_cast %6#1 : vector<8x128xf32> to vector<1x8x128xf32>
    tpu.vector_store %arg8[%c0_17, %c0_18, %c0_19], %29 {strides = array<i32>} : memref<2x8x128xf32, #tpu.memory_space<vmem>>, vector<1x8x128xf32>,
    %c1_20 = arith.constant 1 : index
    %c0_21 = arith.constant 0 : index
    %c0_22 = arith.constant 0 : index
    %30 = vector.load %arg8[%c1_20, %c0_21, %c0_22] : memref<2x8x128xf32, #tpu.memory_space<vmem>>, vector<1x8x128xf32>
    %31 = vector.shape_cast %30 : vector<1x8x128xf32> to vector<8x128xf32>
    %32 = vector.shape_cast %6#3 : vector<8x128xf32> to vector<1x8x128xf32>
    tpu.vector_store %arg8[%c1_20, %c0_21, %c0_22], %32 {strides = array<i32>} : memref<2x8x128xf32, #tpu.memory_space<vmem>>, vector<1x8x128xf32>,
    return
  }
}

</mosaic_0001>

<llo_original>
// kernel: tpu_custom_call.1
$region0: #{tpu_custom_call.1}
  #allocation0 [shape = 'u32[]', space=smem, size = 0x4, offset = 0x4, fixed_abs, tag = 'smem constant byte address 0x4 - core index']
  #allocation1 [shape = 'u32[144,128]{1,0:T(1,128)}', space=vmem, size = 0x12000, scoped, tag = 'internal scratch']
  #allocation2 [shape = 'bf16[12,8,128]{2,1,0:T(8,128)(2,1)}', space=vmem, size = 0x6000, scoped, tag = 'scratch operand']
  #allocation3 [shape = 's32[1]{0:T(128)S(6)}', space=smem, size = 0x200, scoped, tag = 'scoped memory for tpu_custom_call.1']
  %s0 = inlined_call_operand.<no memory space> [shape: s32[1], index: 0, kind: input, shape index: {}]
  %s1 = inlined_call_operand.vmem [shape: s32[8,1], index: 1, kind: input, shape index: {}]
  %s2 = inlined_call_operand.hbm [shape: bf16[12,8,512], index: 2, kind: input, shape index: {}]
  %s3 = inlined_call_operand.hbm [shape: bf16[12,8,512], index: 3, kind: input, shape index: {}]
  %s4 = inlined_call_operand.hbm [shape: bf16[128,512], index: 4, kind: input, shape index: {}]
  %s5 = inlined_call_operand.hbm [shape: bf16[128,512], index: 5, kind: input, shape index: {}]
  %s6 = inlined_call_operand.hbm [shape: bf16[12,8,128], index: 6, kind: output, shape index: {0}]
  %s7 = inlined_call_operand.hbm [shape: f32[2,8,128], index: 7, kind: output, shape index: {1}]
  %s8 = inlined_call_operand.hbm [shape: f32[2,8,128], index: 8, kind: output, shape index: {2}]
  %9 = xla_tuple %s6, %s7, %s8
  %s10 = sld [smem:[#allocation0]]
  $region73: #{tpu_custom_call.1} parent=0
    _
  %s12 = ssub.s32 1, %s10
  %s13 = scalar_select 0, %s12, %s10
  %14 = sst [smem:[#allocation3]] %s0
  $region1: #{tpu_custom_call.1} parent=0
    #allocation4 [shape = 'u8[98304]{0}', space=vmem, size = 0x18000, scoped, tag = 'input window, operand 2, single buffered']
    #allocation5 [shape = 's32[1]{0}', space=sflag, size = 0x4, scoped, tag = 'scoped memory for tpu_custom_call.1']
    #allocation6 [shape = 's32[1]{0}', space=sflag, size = 0x4, scoped, tag = 'scoped memory for tpu_custom_call.1']
    #allocation7 [shape = 'u8[98304]{0}', space=vmem, size = 0x18000, scoped, tag = 'input window, operand 3, single buffered']
    #allocation8 [shape = 's32[1]{0}', space=sflag, size = 0x4, scoped, tag = 'scoped memory for tpu_custom_call.1']
    #allocation9 [shape = 'u8[131072]{0}', space=vmem, size = 0x20000, scoped, tag = 'input window, operand 4, single buffered']
    #allocation10 [shape = 'u8[131072]{0}', space=vmem, size = 0x20000, scoped, tag = 'input window, operand 5, single buffered']
    #allocation11 [shape = 's32[1]{0}', space=sflag, size = 0x4, scoped, tag = 'scoped memory for tpu_custom_call.1']
    #allocation12 [shape = 'u8[24576]{0}', space=vmem, size = 0x6000, scoped, tag = 'output window, operand 0, single buffered']
    #allocation13 [shape = 'u8[8192]{0}', space=vmem, size = 0x2000, scoped, tag = 'output window, operand 1, single buffered']
    #allocation14 [shape = 's32[1]{0}', space=sflag, size = 0x4, scoped, tag = 'scoped memory for tpu_custom_call.1']
    #allocation15 [shape = 'u8[8192]{0}', space=vmem, size = 0x2000, scoped, tag = 'output window, operand 2, single buffered']
    %15 = vsyncpa [#allocation5], 0
    %16 = vsyncpa [#allocation8], 0
    %17 = vsyncpa [#allocation11], 0
    %18 = vsyncpa [#allocation6], 0
    %19 = vsyncpa [#allocation14], 0
    // Predicated region
    $region2: #{tpu_custom_call.1} parent=1 // pred_check
      _
    $region3: #{tpu_custom_call.1} parent=1 // pred_check_branch
      %21 = sbr.rel (0) target = $region5
    $region4: #{tpu_custom_call.1} parent=1 // pred_region
      _
    $region5: #{tpu_custom_call.1} parent=1 // pred_fallthru
      _
    // Predicated region
    $region6: #{tpu_custom_call.1} parent=1 // pred_check
      _
    $region7: #{tpu_custom_call.1} parent=1 // pred_check_branch
      %23 = sbr.rel (0) target = $region9
    $region8: #{tpu_custom_call.1} parent=1 // pred_region
      _
    $region9: #{tpu_custom_call.1} parent=1 // pred_fallthru
      _
    // Predicated region
    $region10: #{tpu_custom_call.1} parent=1 // pred_check
      _
    $region11: #{tpu_custom_call.1} parent=1 // pred_check_branch
      %25 = sbr.rel (0) target = $region13
    $region12: #{tpu_custom_call.1} parent=1 // pred_region
      %s27 = ssub.s32 3072, 3072
      %28 = vsyncadd [#allocation5], %s27
      %s29 = sshll.u32 [#allocation4], 4
      %s30 = int_to_ptr.vmem [resolvable:$true] %s29
      %35 = dma.hbm_to_vmem [thread:$0]  %s2, 3072, %s30, [#allocation5], 256, 256, 16
    $region13: #{tpu_custom_call.1} parent=1 // pred_fallthru
      _
    // Predicated region
    $region14: #{tpu_custom_call.1} parent=1 // pred_check
      _
    $region15: #{tpu_custom_call.1} parent=1 // pred_check_branch
      %37 = sbr.rel (0) target = $region17
    $region16: #{tpu_custom_call.1} parent=1 // pred_region
      %s39 = ssub.s32 3072, 3072
      %40 = vsyncadd [#allocation8], %s39
      %s41 = sshll.u32 [#allocation7], 4
      %s42 = int_to_ptr.vmem [resolvable:$true] %s41
      %47 = dma.hbm_to_vmem [thread:$0]  %s3, 3072, %s42, [#allocation8], 256, 256, 16
    $region17: #{tpu_custom_call.1} parent=1 // pred_fallthru
      _
    // Predicated region
    $region18: #{tpu_custom_call.1} parent=1 // pred_check
      _
    $region19: #{tpu_custom_call.1} parent=1 // pred_check_branch
      %49 = sbr.rel (0) target = $region21
    $region20: #{tpu_custom_call.1} parent=1 // pred_region
      %s51 = ssub.s32 4096, 4096
      %52 = vsyncadd [#allocation8], %s51
      %s53 = sshll.u32 [#allocation9], 4
      %s54 = int_to_ptr.vmem [resolvable:$true] %s53
      %59 = dma.hbm_to_vmem [thread:$0]  %s4, 4096, %s54, [#allocation8], 256, 256, 16
    $region21: #{tpu_custom_call.1} parent=1 // pred_fallthru
      _
    // Predicated region
    $region22: #{tpu_custom_call.1} parent=1 // pred_check
      _
    $region23: #{tpu_custom_call.1} parent=1 // pred_check_branch
      %61 = sbr.rel (0) target = $region25
    $region24: #{tpu_custom_call.1} parent=1 // pred_region
      %s63 = ssub.s32 4096, 4096
      %64 = vsyncadd [#allocation11], %s63
      %s65 = sshll.u32 [#allocation10], 4
      %s66 = int_to_ptr.vmem [resolvable:$true] %s65
      %71 = dma.hbm_to_vmem [thread:$0]  %s5, 4096, %s66, [#allocation11], 256, 256, 16
    $region25: #{tpu_custom_call.1} parent=1 // pred_fallthru
      _
    // Predicated region
    $region26: #{tpu_custom_call.1} parent=1 // pred_check
      _
    $region27: #{tpu_custom_call.1} parent=1 // pred_check_branch
      %73 = sbr.rel (0) target = $region29
    $region28: #{tpu_custom_call.1} parent=1 // pred_region
      %74 = dma.done [#allocation5], 3072
    $region29: #{tpu_custom_call.1} parent=1 // pred_fallthru
      _
    // Predicated region
    $region30: #{tpu_custom_call.1} parent=1 // pred_check
      _
    $region31: #{tpu_custom_call.1} parent=1 // pred_check_branch
      %76 = sbr.rel (0) target = $region33
    $region32: #{tpu_custom_call.1} parent=1 // pred_region
      %77 = dma.done [#allocation8], 3072
    $region33: #{tpu_custom_call.1} parent=1 // pred_fallthru
      _
    // Predicated region
    $region34: #{tpu_custom_call.1} parent=1 // pred_check
      _
    $region35: #{tpu_custom_call.1} parent=1 // pred_check_branch
      %79 = sbr.rel (0) target = $region37
    $region36: #{tpu_custom_call.1} parent=1 // pred_region
      %80 = dma.done [#allocation8], 4096
    $region37: #{tpu_custom_call.1} parent=1 // pred_fallthru
      _
    // Predicated region
    $region38: #{tpu_custom_call.1} parent=1 // pred_check
      _
    $region39: #{tpu_custom_call.1} parent=1 // pred_check_branch
      %82 = sbr.rel (0) target = $region41
    $region40: #{tpu_custom_call.1} parent=1 // pred_region
      %83 = dma.done [#allocation11], 4096
    $region41: #{tpu_custom_call.1} parent=1 // pred_fallthru
      _
    %s85 = sld [smem:[#allocation3]]
    %p86 = scmp.lt.s32.totalorder %s85, 12
    %s87 = scalar_select %p86, %s85, 12
    %v88 = vld [vmem:[%s1] sm:$0xff]
    // While loop
    $region42: #{tpu_custom_call.1} parent=1 // loop_pre_header
      _
    $region43: #{tpu_custom_call.1} parent=1 // loop_header
      %s90 = sphi 0, %s92
      %p91 = scmp.ge.s32.totalorder %s90, %s87
      %v95 = vphi 0.0, %v414
      %v96 = vphi 0.0, %v415
      %v97 = vphi 0.0, %v734
      %v98 = vphi 0.0, %v735
    $region44: #{tpu_custom_call.1} parent=1 // loop_header_branch
      %94 = sbr.rel (%p91) target = $region48
    $region45: #{tpu_custom_call.1} parent=1 // loop_body
      %s99 = ssub.s32 %s87, 1
      %s100 = ssub.s32 %s99, %s90
      %s101 = smul.u32 %s90, 4
      %s102 = smul.addr %s101, 4
      %s103 = scalar_lea.vmem [#allocation4], %s102
      %v104 = vld [vmem:[%s103] sm:$0xff]
      %v105 = vld [vmem:[%s103 + $0x8] sm:$0xff]
      %v106 = vunpack.c.l.bf16 %v104
      %v107 = vunpack.c.h.bf16 %v104
      %v108 = vunpack.c.l.bf16 %v105
      %v109 = vunpack.c.h.bf16 %v105
      %v110 = vpack.c.bf16 %v95, %v95
      %v111 = vld [vmem:[#allocation9] sm:$0xff]
      %v112 = vld [vmem:[#allocation9 + $0x8] sm:$0xff]
      %v113 = vld [vmem:[#allocation9 + $0x10] sm:$0xff]
      %v114 = vld [vmem:[#allocation9 + $0x18] sm:$0xff]
      %v115 = vld [vmem:[#allocation9 + $0x20] sm:$0xff]
      %v116 = vld [vmem:[#allocation9 + $0x28] sm:$0xff]
      %v117 = vld [vmem:[#allocation9 + $0x30] sm:$0xff]
      %v118 = vld [vmem:[#allocation9 + $0x38] sm:$0xff]
      %v119 = vld [vmem:[#allocation9 + $0x40] sm:$0xff]
      %v120 = vld [vmem:[#allocation9 + $0x48] sm:$0xff]
      %v121 = vld [vmem:[#allocation9 + $0x50] sm:$0xff]
      %v122 = vld [vmem:[#allocation9 + $0x58] sm:$0xff]
      %v123 = vld [vmem:[#allocation9 + $0x60] sm:$0xff]
      %v124 = vld [vmem:[#allocation9 + $0x68] sm:$0xff]
      %v125 = vld [vmem:[#allocation9 + $0x70] sm:$0xff]
      %v126 = vld [vmem:[#allocation9 + $0x78] sm:$0xff]
      %v127 = vld [vmem:[#allocation9 + $0x80] sm:$0xff]
      %v128 = vld [vmem:[#allocation9 + $0x88] sm:$0xff]
      %v129 = vld [vmem:[#allocation9 + $0x90] sm:$0xff]
      %v130 = vld [vmem:[#allocation9 + $0x98] sm:$0xff]
      %v131 = vld [vmem:[#allocation9 + $0xa0] sm:$0xff]
      %v132 = vld [vmem:[#allocation9 + $0xa8] sm:$0xff]
      %v133 = vld [vmem:[#allocation9 + $0xb0] sm:$0xff]
      %v134 = vld [vmem:[#allocation9 + $0xb8] sm:$0xff]
      %v135 = vld [vmem:[#allocation9 + $0xc0] sm:$0xff]
      %v136 = vld [vmem:[#allocation9 + $0xc8] sm:$0xff]
      %v137 = vld [vmem:[#allocation9 + $0xd0] sm:$0xff]
      %v138 = vld [vmem:[#allocation9 + $0xd8] sm:$0xff]
      %v139 = vld [vmem:[#allocation9 + $0xe0] sm:$0xff]
      %v140 = vld [vmem:[#allocation9 + $0xe8] sm:$0xff]
      %v141 = vld [vmem:[#allocation9 + $0xf0] sm:$0xff]
      %v142 = vld [vmem:[#allocation9 + $0xf8] sm:$0xff]
      %v175 = vunpack.c.l.b16 %v111
      %v176 = vunpack.c.h.b16 %v111
      %v177 = vunpack.c.l.b16 %v112
      %v178 = vunpack.c.h.b16 %v112
      %v179 = vunpack.c.l.b16 %v113
      %v180 = vunpack.c.h.b16 %v113
      %v181 = vunpack.c.l.b16 %v114
      %v182 = vunpack.c.h.b16 %v114
      %v183 = vunpack.c.l.b16 %v115
      %v184 = vunpack.c.h.b16 %v115
      %v185 = vunpack.c.l.b16 %v116
      %v186 = vunpack.c.h.b16 %v116
      %v187 = vunpack.c.l.b16 %v117
      %v188 = vunpack.c.h.b16 %v117
      %v189 = vunpack.c.l.b16 %v118
      %v190 = vunpack.c.h.b16 %v118
      %v191 = vunpack.c.l.b16 %v119
      %v192 = vunpack.c.h.b16 %v119
      %v193 = vunpack.c.l.b16 %v120
      %v194 = vunpack.c.h.b16 %v120
      %v195 = vunpack.c.l.b16 %v121
      %v196 = vunpack.c.h.b16 %v121
      %v197 = vunpack.c.l.b16 %v122
      %v198 = vunpack.c.h.b16 %v122
      %v199 = vunpack.c.l.b16 %v123
      %v200 = vunpack.c.h.b16 %v123
      %v201 = vunpack.c.l.b16 %v124
      %v202 = vunpack.c.h.b16 %v124
      %v203 = vunpack.c.l.b16 %v125
      %v204 = vunpack.c.h.b16 %v125
      %v205 = vunpack.c.l.b16 %v126
      %v206 = vunpack.c.h.b16 %v126
      %v207 = vunpack.c.l.b16 %v127
      %v208 = vunpack.c.h.b16 %v127
      %v209 = vunpack.c.l.b16 %v128
      %v210 = vunpack.c.h.b16 %v128
      %v211 = vunpack.c.l.b16 %v129
      %v212 = vunpack.c.h.b16 %v129
      %v213 = vunpack.c.l.b16 %v130
      %v214 = vunpack.c.h.b16 %v130
      %v215 = vunpack.c.l.b16 %v131
      %v216 = vunpack.c.h.b16 %v131
      %v217 = vunpack.c.l.b16 %v132
      %v218 = vunpack.c.h.b16 %v132
      %v219 = vunpack.c.l.b16 %v133
      %v220 = vunpack.c.h.b16 %v133
      %v221 = vunpack.c.l.b16 %v134
      %v222 = vunpack.c.h.b16 %v134
      %v223 = vunpack.c.l.b16 %v135
      %v224 = vunpack.c.h.b16 %v135
      %v225 = vunpack.c.l.b16 %v136
      %v226 = vunpack.c.h.b16 %v136
      %v227 = vunpack.c.l.b16 %v137
      %v228 = vunpack.c.h.b16 %v137
      %v229 = vunpack.c.l.b16 %v138
      %v230 = vunpack.c.h.b16 %v138
      %v231 = vunpack.c.l.b16 %v139
      %v232 = vunpack.c.h.b16 %v139
      %v233 = vunpack.c.l.b16 %v140
      %v234 = vunpack.c.h.b16 %v140
      %v235 = vunpack.c.l.b16 %v141
      %v236 = vunpack.c.h.b16 %v141
      %v237 = vunpack.c.l.b16 %v142
      %v238 = vunpack.c.h.b16 %v142
      %v239 = vpack.c.b16 %v179, %v175
      %v240 = vpack.c.b16 %v180, %v176
      %v241 = vpack.c.b16 %v181, %v177
      %v242 = vpack.c.b16 %v182, %v178
      %v243 = vpack.c.b16 %v187, %v183
      %v244 = vpack.c.b16 %v188, %v184
      %v245 = vpack.c.b16 %v189, %v185
      %v246 = vpack.c.b16 %v190, %v186
      %v247 = vpack.c.b16 %v195, %v191
      %v248 = vpack.c.b16 %v196, %v192
      %v249 = vpack.c.b16 %v197, %v193
      %v250 = vpack.c.b16 %v198, %v194
      %v251 = vpack.c.b16 %v203, %v199
      %v252 = vpack.c.b16 %v204, %v200
      %v253 = vpack.c.b16 %v205, %v201
      %v254 = vpack.c.b16 %v206, %v202
      %v255 = vpack.c.b16 %v211, %v207
      %v256 = vpack.c.b16 %v212, %v208
      %v257 = vpack.c.b16 %v213, %v209
      %v258 = vpack.c.b16 %v214, %v210
      %v259 = vpack.c.b16 %v219, %v215
      %v260 = vpack.c.b16 %v220, %v216
      %v261 = vpack.c.b16 %v221, %v217
      %v262 = vpack.c.b16 %v222, %v218
      %v263 = vpack.c.b16 %v227, %v223
      %v264 = vpack.c.b16 %v228, %v224
      %v265 = vpack.c.b16 %v229, %v225
      %v266 = vpack.c.b16 %v230, %v226
      %v267 = vpack.c.b16 %v235, %v231
      %v268 = vpack.c.b16 %v236, %v232
      %v269 = vpack.c.b16 %v237, %v233
      %v270 = vpack.c.b16 %v238, %v234
      %303 = vmatprep.subr.bf16.mxu0 %v240
      %304 = vmatpush1.bf16.msra.mxu0 %v239
      %305 = vmatprep.subr.bf16.mxu0 %v244
      %306 = vmatpush1.bf16.msra.mxu0 %v243
      %307 = vmatprep.subr.bf16.mxu0 %v248
      %308 = vmatpush1.bf16.msra.mxu0 %v247
      %309 = vmatprep.subr.bf16.mxu0 %v252
      %310 = vmatpush1.bf16.msra.mxu0 %v251
      %311 = vmatprep.subr.bf16.mxu0 %v256
      %312 = vmatpush1.bf16.msra.mxu0 %v255
      %313 = vmatprep.subr.bf16.mxu0 %v260
      %314 = vmatpush1.bf16.msra.mxu0 %v259
      %315 = vmatprep.subr.bf16.mxu0 %v264
      %316 = vmatpush1.bf16.msra.mxu0 %v263
      %317 = vmatprep.subr.bf16.mxu0 %v268
      %318 = vmatpush1.bf16.msra.mxu0 %v267
      %319 = vmatprep.subr.bf16.mxu0 0
      %320 = vmatpush1.bf16.msra.mxu0 0
      %321 = vmatprep.subr.bf16.mxu0 0
      %322 = vmatpush1.bf16.msra.mxu0 0
      %323 = vmatprep.subr.bf16.mxu0 0
      %324 = vmatpush1.bf16.msra.mxu0 0
      %325 = vmatprep.subr.bf16.mxu0 0
      %326 = vmatpush1.bf16.msra.mxu0 0
      %327 = vmatprep.subr.bf16.mxu0 0
      %328 = vmatpush1.bf16.msra.mxu0 0
      %329 = vmatprep.subr.bf16.mxu0 0
      %330 = vmatpush1.bf16.msra.mxu0 0
      %331 = vmatprep.subr.bf16.mxu0 0
      %332 = vmatpush1.bf16.msra.mxu0 0
      %333 = vmatprep.subr.bf16.mxu0 0
      %334 = vmatpush1.bf16.msra.mxu0 0
      %335 = vmatprep.mubr.bf16.mxu0 0
      %336 = vmatmul.mubr.bf16.gmra.mrb[0].mxu0 %v110
      %v337 = vpop.f32.mrb[0].mxu0
      %v338 = vadd.f32 0.0, %v337
      %v339 = vpop.f32.mrb[0].mxu0
      %v340 = vadd.f32 0.0, %v339
      %v341 = vpop.f32.mrb[0].mxu0
      %v342 = vpop.f32.mrb[0].mxu0
      %343 = vdwg.mxu0
      %344 = vmatprep.subr.bf16.mxu0 %v242
      %345 = vmatpush1.bf16.msra.mxu0 %v241
      %346 = vmatprep.subr.bf16.mxu0 %v246
      %347 = vmatpush1.bf16.msra.mxu0 %v245
      %348 = vmatprep.subr.bf16.mxu0 %v250
      %349 = vmatpush1.bf16.msra.mxu0 %v249
      %350 = vmatprep.subr.bf16.mxu0 %v254
      %351 = vmatpush1.bf16.msra.mxu0 %v253
      %352 = vmatprep.subr.bf16.mxu0 %v258
      %353 = vmatpush1.bf16.msra.mxu0 %v257
      %354 = vmatprep.subr.bf16.mxu0 %v262
      %355 = vmatpush1.bf16.msra.mxu0 %v261
      %356 = vmatprep.subr.bf16.mxu0 %v266
      %357 = vmatpush1.bf16.msra.mxu0 %v265
      %358 = vmatprep.subr.bf16.mxu0 %v270
      %359 = vmatpush1.bf16.msra.mxu0 %v269
      %360 = vmatprep.subr.bf16.mxu0 0
      %361 = vmatpush1.bf16.msra.mxu0 0
      %362 = vmatprep.subr.bf16.mxu0 0
      %363 = vmatpush1.bf16.msra.mxu0 0
      %364 = vmatprep.subr.bf16.mxu0 0
      %365 = vmatpush1.bf16.msra.mxu0 0
      %366 = vmatprep.subr.bf16.mxu0 0
      %367 = vmatpush1.bf16.msra.mxu0 0
      %368 = vmatprep.subr.bf16.mxu0 0
      %369 = vmatpush1.bf16.msra.mxu0 0
      %370 = vmatprep.subr.bf16.mxu0 0
      %371 = vmatpush1.bf16.msra.mxu0 0
      %372 = vmatprep.subr.bf16.mxu0 0
      %373 = vmatpush1.bf16.msra.mxu0 0
      %374 = vmatprep.subr.bf16.mxu0 0
      %375 = vmatpush1.bf16.msra.mxu0 0
      %376 = vmatprep.mubr.bf16.mxu0 0
      %377 = vmatmul.mubr.bf16.gmra.mrb[0].mxu0 %v110
      %v378 = vpop.f32.mrb[0].mxu0
      %v379 = vadd.f32 0.0, %v378
      %v380 = vpop.f32.mrb[0].mxu0
      %v381 = vadd.f32 0.0, %v380
      %v382 = vpop.f32.mrb[0].mxu0
      %v383 = vpop.f32.mrb[0].mxu0
      %384 = vdwg.mxu0
      %v385 = vadd.f32 %v106, %v338
      %v386 = vadd.f32 %v107, %v340
      %v387 = vadd.f32 %v108, %v379
      %v388 = vadd.f32 %v109, %v381
      %v389 = vmul.f32 %v385, 0.5
      %v390 = vtanh.pop %v389
      %v391 = vmul.f32 %v390, 0.5
      %v392 = vadd.f32 %v391, 0.5
      %v393 = vmul.f32 %v386, 0.5
      %v394 = vtanh.pop %v393
      %v395 = vmul.f32 %v394, 0.5
      %v396 = vadd.f32 %v395, 0.5
      %v397 = vtanh.pop %v387
      %v398 = vmul.f32 %v388, 0.5
      %v399 = vtanh.pop %v398
      %v400 = vmul.f32 %v399, 0.5
      %v401 = vadd.f32 %v400, 0.5
      %v402 = vmul.f32 %v396, %v96
      %v403 = vmul.f32 %v392, %v397
      %v404 = vadd.f32 %v402, %v403
      %v405 = vtanh.pop %v404
      %v406 = vmul.f32 %v401, %v405
      %v407 = vstv %s90
      %vm408 = vcmp.lt.s32.totalorder %v407, %v88
      %v409 = vsel %vm408, 1, 0
      %410 = vset.pattern.permute.xlu0 0
      %411 = vperm.xlu0 %410, %v409
      %v412 = vpop.permute.xlu0 %411
      %vm413 = vcmp.eq.s32.totalorder %v412, 1
      %v414 = vsel %vm413, %v406, %v95
      %v415 = vsel %vm413, %v404, %v96
      %v416 = vsel %vm413, %v406, 0.0
      %v417 = vpack.c.bf16 %v416, %v416
      %s418 = smul.addr %s90, 4
      %s419 = scalar_lea.vmem [#allocation12], %s418
      %420 = vst [vmem:[%s419] sm:$0xf] %v417
      %s421 = smul.u32 %s100, 4
      %s422 = smul.addr %s421, 4
      %s423 = scalar_lea.vmem [#allocation7], %s422
      %v424 = vld [vmem:[%s423] sm:$0xff]
      %v425 = vld [vmem:[%s423 + $0x8] sm:$0xff]
      %v426 = vunpack.c.l.bf16 %v424
      %v427 = vunpack.c.h.bf16 %v424
      %v428 = vunpack.c.l.bf16 %v425
      %v429 = vunpack.c.h.bf16 %v425
      %v430 = vpack.c.bf16 %v97, %v97
      %v431 = vld [vmem:[#allocation10] sm:$0xff]
      %v432 = vld [vmem:[#allocation10 + $0x8] sm:$0xff]
      %v433 = vld [vmem:[#allocation10 + $0x10] sm:$0xff]
      %v434 = vld [vmem:[#allocation10 + $0x18] sm:$0xff]
      %v435 = vld [vmem:[#allocation10 + $0x20] sm:$0xff]
      %v436 = vld [vmem:[#allocation10 + $0x28] sm:$0xff]
      %v437 = vld [vmem:[#allocation10 + $0x30] sm:$0xff]
      %v438 = vld [vmem:[#allocation10 + $0x38] sm:$0xff]
      %v439 = vld [vmem:[#allocation10 + $0x40] sm:$0xff]
      %v440 = vld [vmem:[#allocation10 + $0x48] sm:$0xff]
      %v441 = vld [vmem:[#allocation10 + $0x50] sm:$0xff]
      %v442 = vld [vmem:[#allocation10 + $0x58] sm:$0xff]
      %v443 = vld [vmem:[#allocation10 + $0x60] sm:$0xff]
      %v444 = vld [vmem:[#allocation10 + $0x68] sm:$0xff]
      %v445 = vld [vmem:[#allocation10 + $0x70] sm:$0xff]
      %v446 = vld [vmem:[#allocation10 + $0x78] sm:$0xff]
      %v447 = vld [vmem:[#allocation10 + $0x80] sm:$0xff]
      %v448 = vld [vmem:[#allocation10 + $0x88] sm:$0xff]
      %v449 = vld [vmem:[#allocation10 + $0x90] sm:$0xff]
      %v450 = vld [vmem:[#allocation10 + $0x98] sm:$0xff]
      %v451 = vld [vmem:[#allocation10 + $0xa0] sm:$0xff]
      %v452 = vld [vmem:[#allocation10 + $0xa8] sm:$0xff]
      %v453 = vld [vmem:[#allocation10 + $0xb0] sm:$0xff]
      %v454 = vld [vmem:[#allocation10 + $0xb8] sm:$0xff]
      %v455 = vld [vmem:[#allocation10 + $0xc0] sm:$0xff]
      %v456 = vld [vmem:[#allocation10 + $0xc8] sm:$0xff]
      %v457 = vld [vmem:[#allocation10 + $0xd0] sm:$0xff]
      %v458 = vld [vmem:[#allocation10 + $0xd8] sm:$0xff]
      %v459 = vld [vmem:[#allocation10 + $0xe0] sm:$0xff]
      %v460 = vld [vmem:[#allocation10 + $0xe8] sm:$0xff]
      %v461 = vld [vmem:[#allocation10 + $0xf0] sm:$0xff]
      %v462 = vld [vmem:[#allocation10 + $0xf8] sm:$0xff]
      %v495 = vunpack.c.l.b16 %v431
      %v496 = vunpack.c.h.b16 %v431
      %v497 = vunpack.c.l.b16 %v432
      %v498 = vunpack.c.h.b16 %v432
      %v499 = vunpack.c.l.b16 %v433
      %v500 = vunpack.c.h.b16 %v433
      %v501 = vunpack.c.l.b16 %v434
      %v502 = vunpack.c.h.b16 %v434
      %v503 = vunpack.c.l.b16 %v435
      %v504 = vunpack.c.h.b16 %v435
      %v505 = vunpack.c.l.b16 %v436
      %v506 = vunpack.c.h.b16 %v436
      %v507 = vunpack.c.l.b16 %v437
      %v508 = vunpack.c.h.b16 %v437
      %v509 = vunpack.c.l.b16 %v438
      %v510 = vunpack.c.h.b16 %v438
      %v511 = vunpack.c.l.b16 %v439
      %v512 = vunpack.c.h.b16 %v439
      %v513 = vunpack.c.l.b16 %v440
      %v514 = vunpack.c.h.b16 %v440
      %v515 = vunpack.c.l.b16 %v441
      %v516 = vunpack.c.h.b16 %v441
      %v517 = vunpack.c.l.b16 %v442
      %v518 = vunpack.c.h.b16 %v442
      %v519 = vunpack.c.l.b16 %v443
      %v520 = vunpack.c.h.b16 %v443
      %v521 = vunpack.c.l.b16 %v444
      %v522 = vunpack.c.h.b16 %v444
      %v523 = vunpack.c.l.b16 %v445
      %v524 = vunpack.c.h.b16 %v445
      %v525 = vunpack.c.l.b16 %v446
      %v526 = vunpack.c.h.b16 %v446
      %v527 = vunpack.c.l.b16 %v447
      %v528 = vunpack.c.h.b16 %v447
      %v529 = vunpack.c.l.b16 %v448
      %v530 = vunpack.c.h.b16 %v448
      %v531 = vunpack.c.l.b16 %v449
      %v532 = vunpack.c.h.b16 %v449
      %v533 = vunpack.c.l.b16 %v450
      %v534 = vunpack.c.h.b16 %v450
      %v535 = vunpack.c.l.b16 %v451
      %v536 = vunpack.c.h.b16 %v451
      %v537 = vunpack.c.l.b16 %v452
      %v538 = vunpack.c.h.b16 %v452
      %v539 = vunpack.c.l.b16 %v453
      %v540 = vunpack.c.h.b16 %v453
      %v541 = vunpack.c.l.b16 %v454
      %v542 = vunpack.c.h.b16 %v454
      %v543 = vunpack.c.l.b16 %v455
      %v544 = vunpack.c.h.b16 %v455
      %v545 = vunpack.c.l.b16 %v456
      %v546 = vunpack.c.h.b16 %v456
      %v547 = vunpack.c.l.b16 %v457
      %v548 = vunpack.c.h.b16 %v457
      %v549 = vunpack.c.l.b16 %v458
      %v550 = vunpack.c.h.b16 %v458
      %v551 = vunpack.c.l.b16 %v459
      %v552 = vunpack.c.h.b16 %v459
      %v553 = vunpack.c.l.b16 %v460
      %v554 = vunpack.c.h.b16 %v460
      %v555 = vunpack.c.l.b16 %v461
      %v556 = vunpack.c.h.b16 %v461
      %v557 = vunpack.c.l.b16 %v462
      %v558 = vunpack.c.h.b16 %v462
      %v559 = vpack.c.b16 %v499, %v495
      %v560 = vpack.c.b16 %v500, %v496
      %v561 = vpack.c.b16 %v501, %v497
      %v562 = vpack.c.b16 %v502, %v498
      %v563 = vpack.c.b16 %v507, %v503
      %v564 = vpack.c.b16 %v508, %v504
      %v565 = vpack.c.b16 %v509, %v505
      %v566 = vpack.c.b16 %v510, %v506
      %v567 = vpack.c.b16 %v515, %v511
      %v568 = vpack.c.b16 %v516, %v512
      %v569 = vpack.c.b16 %v517, %v513
      %v570 = vpack.c.b16 %v518, %v514
      %v571 = vpack.c.b16 %v523, %v519
      %v572 = vpack.c.b16 %v524, %v520
      %v573 = vpack.c.b16 %v525, %v521
      %v574 = vpack.c.b16 %v526, %v522
      %v575 = vpack.c.b16 %v531, %v527
      %v576 = vpack.c.b16 %v532, %v528
      %v577 = vpack.c.b16 %v533, %v529
      %v578 = vpack.c.b16 %v534, %v530
      %v579 = vpack.c.b16 %v539, %v535
      %v580 = vpack.c.b16 %v540, %v536
      %v581 = vpack.c.b16 %v541, %v537
      %v582 = vpack.c.b16 %v542, %v538
      %v583 = vpack.c.b16 %v547, %v543
      %v584 = vpack.c.b16 %v548, %v544
      %v585 = vpack.c.b16 %v549, %v545
      %v586 = vpack.c.b16 %v550, %v546
      %v587 = vpack.c.b16 %v555, %v551
      %v588 = vpack.c.b16 %v556, %v552
      %v589 = vpack.c.b16 %v557, %v553
      %v590 = vpack.c.b16 %v558, %v554
      %623 = vmatprep.subr.bf16.mxu0 %v560
      %624 = vmatpush1.bf16.msra.mxu0 %v559
      %625 = vmatprep.subr.bf16.mxu0 %v564
      %626 = vmatpush1.bf16.msra.mxu0 %v563
      %627 = vmatprep.subr.bf16.mxu0 %v568
      %628 = vmatpush1.bf16.msra.mxu0 %v567
      %629 = vmatprep.subr.bf16.mxu0 %v572
      %630 = vmatpush1.bf16.msra.mxu0 %v571
      %631 = vmatprep.subr.bf16.mxu0 %v576
      %632 = vmatpush1.bf16.msra.mxu0 %v575
      %633 = vmatprep.subr.bf16.mxu0 %v580
      %634 = vmatpush1.bf16.msra.mxu0 %v579
      %635 = vmatprep.subr.bf16.mxu0 %v584
      %636 = vmatpush1.bf16.msra.mxu0 %v583
      %637 = vmatprep.subr.bf16.mxu0 %v588
      %638 = vmatpush1.bf16.msra.mxu0 %v587
      %639 = vmatprep.subr.bf16.mxu0 0
      %640 = vmatpush1.bf16.msra.mxu0 0
      %641 = vmatprep.subr.bf16.mxu0 0
      %642 = vmatpush1.bf16.msra.mxu0 0
      %643 = vmatprep.subr.bf16.mxu0 0
      %644 = vmatpush1.bf16.msra.mxu0 0
      %645 = vmatprep.subr.bf16.mxu0 0
      %646 = vmatpush1.bf16.msra.mxu0 0
      %647 = vmatprep.subr.bf16.mxu0 0
      %648 = vmatpush1.bf16.msra.mxu0 0
      %649 = vmatprep.subr.bf16.mxu0 0
      %650 = vmatpush1.bf16.msra.mxu0 0
      %651 = vmatprep.subr.bf16.mxu0 0
      %652 = vmatpush1.bf16.msra.mxu0 0
      %653 = vmatprep.subr.bf16.mxu0 0
      %654 = vmatpush1.bf16.msra.mxu0 0
      %655 = vmatprep.mubr.bf16.mxu0 0
      %656 = vmatmul.mubr.bf16.gmra.mrb[0].mxu0 %v430
      %v657 = vpop.f32.mrb[0].mxu0
      %v658 = vadd.f32 0.0, %v657
      %v659 = vpop.f32.mrb[0].mxu0
      %v660 = vadd.f32 0.0, %v659
      %v661 = vpop.f32.mrb[0].mxu0
      %v662 = vpop.f32.mrb[0].mxu0
      %663 = vdwg.mxu0
      %664 = vmatprep.subr.bf16.mxu0 %v562
      %665 = vmatpush1.bf16.msra.mxu0 %v561
      %666 = vmatprep.subr.bf16.mxu0 %v566
      %667 = vmatpush1.bf16.msra.mxu0 %v565
      %668 = vmatprep.subr.bf16.mxu0 %v570
      %669 = vmatpush1.bf16.msra.mxu0 %v569
      %670 = vmatprep.subr.bf16.mxu0 %v574
      %671 = vmatpush1.bf16.msra.mxu0 %v573
      %672 = vmatprep.subr.bf16.mxu0 %v578
      %673 = vmatpush1.bf16.msra.mxu0 %v577
      %674 = vmatprep.subr.bf16.mxu0 %v582
      %675 = vmatpush1.bf16.msra.mxu0 %v581
      %676 = vmatprep.subr.bf16.mxu0 %v586
      %677 = vmatpush1.bf16.msra.mxu0 %v585
      %678 = vmatprep.subr.bf16.mxu0 %v590
      %679 = vmatpush1.bf16.msra.mxu0 %v589
      %680 = vmatprep.subr.bf16.mxu0 0
      %681 = vmatpush1.bf16.msra.mxu0 0
      %682 = vmatprep.subr.bf16.mxu0 0
      %683 = vmatpush1.bf16.msra.mxu0 0
      %684 = vmatprep.subr.bf16.mxu0 0
      %685 = vmatpush1.bf16.msra.mxu0 0
      %686 = vmatprep.subr.bf16.mxu0 0
      %687 = vmatpush1.bf16.msra.mxu0 0
      %688 = vmatprep.subr.bf16.mxu0 0
      %689 = vmatpush1.bf16.msra.mxu0 0
      %690 = vmatprep.subr.bf16.mxu0 0
      %691 = vmatpush1.bf16.msra.mxu0 0
      %692 = vmatprep.subr.bf16.mxu0 0
      %693 = vmatpush1.bf16.msra.mxu0 0
      %694 = vmatprep.subr.bf16.mxu0 0
      %695 = vmatpush1.bf16.msra.mxu0 0
      %696 = vmatprep.mubr.bf16.mxu0 0
      %697 = vmatmul.mubr.bf16.gmra.mrb[0].mxu0 %v430
      %v698 = vpop.f32.mrb[0].mxu0
      %v699 = vadd.f32 0.0, %v698
      %v700 = vpop.f32.mrb[0].mxu0
      %v701 = vadd.f32 0.0, %v700
      %v702 = vpop.f32.mrb[0].mxu0
      %v703 = vpop.f32.mrb[0].mxu0
      %704 = vdwg.mxu0
      %v705 = vadd.f32 %v426, %v658
      %v706 = vadd.f32 %v427, %v660
      %v707 = vadd.f32 %v428, %v699
      %v708 = vadd.f32 %v429, %v701
      %v709 = vmul.f32 %v705, 0.5
      %v710 = vtanh.pop %v709
      %v711 = vmul.f32 %v710, 0.5
      %v712 = vadd.f32 %v711, 0.5
      %v713 = vmul.f32 %v706, 0.5
      %v714 = vtanh.pop %v713
      %v715 = vmul.f32 %v714, 0.5
      %v716 = vadd.f32 %v715, 0.5
      %v717 = vtanh.pop %v707
      %v718 = vmul.f32 %v708, 0.5
      %v719 = vtanh.pop %v718
      %v720 = vmul.f32 %v719, 0.5
      %v721 = vadd.f32 %v720, 0.5
      %v722 = vmul.f32 %v716, %v98
      %v723 = vmul.f32 %v712, %v717
      %v724 = vadd.f32 %v722, %v723
      %v725 = vtanh.pop %v724
      %v726 = vmul.f32 %v721, %v725
      %v727 = vstv %s100
      %vm728 = vcmp.lt.s32.totalorder %v727, %v88
      %v729 = vsel %vm728, 1, 0
      %730 = vset.pattern.permute.xlu0 0
      %731 = vperm.xlu0 %730, %v729
      %v732 = vpop.permute.xlu0 %731
      %vm733 = vcmp.eq.s32.totalorder %v732, 1
      %v734 = vsel %vm733, %v726, %v97
      %v735 = vsel %vm733, %v724, %v98
      %v736 = vsel %vm733, %v726, 0.0
      %v737 = vpack.c.bf16 %v736, %v736
      %s738 = smul.addr %s100, 4
      %s739 = scalar_lea.vmem [#allocation2], %s738
      %740 = vst [vmem:[%s739] sm:$0xf] %v737
    $region46: #{tpu_custom_call.1} parent=1 // loop_footer
      %s92 = sadd.s32 %s90, 1
    $region47: #{tpu_custom_call.1} parent=1 // loop_footer_branch
      %89 = sbr.rel target = $region43
    $region48: #{tpu_custom_call.1} parent=1 // loop_exit
      _
    %v741 = vld [vmem:[#allocation12] sm:$0xf]
    %v742 = vld [vmem:[#allocation12 + $0x4] sm:$0xf]
    %v743 = vld [vmem:[#allocation12 + $0x8] sm:$0xf]
    %v744 = vld [vmem:[#allocation12 + $0xc] sm:$0xf]
    %v745 = vld [vmem:[#allocation12 + $0x10] sm:$0xf]
    %v746 = vld [vmem:[#allocation12 + $0x14] sm:$0xf]
    %v747 = vld [vmem:[#allocation12 + $0x18] sm:$0xf]
    %v748 = vld [vmem:[#allocation12 + $0x1c] sm:$0xf]
    %v749 = vld [vmem:[#allocation12 + $0x20] sm:$0xf]
    %v750 = vld [vmem:[#allocation12 + $0x24] sm:$0xf]
    %v751 = vld [vmem:[#allocation12 + $0x28] sm:$0xf]
    %v752 = vld [vmem:[#allocation12 + $0x2c] sm:$0xf]
    %v753 = vunpack.c.l.bf16 %v741
    %v754 = vunpack.c.l.bf16 %v742
    %v755 = vunpack.c.l.bf16 %v743
    %v756 = vunpack.c.l.bf16 %v744
    %v757 = vunpack.c.l.bf16 %v745
    %v758 = vunpack.c.l.bf16 %v746
    %v759 = vunpack.c.l.bf16 %v747
    %v760 = vunpack.c.l.bf16 %v748
    %v761 = vunpack.c.l.bf16 %v749
    %v762 = vunpack.c.l.bf16 %v750
    %v763 = vunpack.c.l.bf16 %v751
    %v764 = vunpack.c.l.bf16 %v752
    %v765 = vld [vmem:[#allocation2] sm:$0xf]
    %v766 = vld [vmem:[#allocation2 + $0x4] sm:$0xf]
    %v767 = vld [vmem:[#allocation2 + $0x8] sm:$0xf]
    %v768 = vld [vmem:[#allocation2 + $0xc] sm:$0xf]
    %v769 = vld [vmem:[#allocation2 + $0x10] sm:$0xf]
    %v770 = vld [vmem:[#allocation2 + $0x14] sm:$0xf]
    %v771 = vld [vmem:[#allocation2 + $0x18] sm:$0xf]
    %v772 = vld [vmem:[#allocation2 + $0x1c] sm:$0xf]
    %v773 = vld [vmem:[#allocation2 + $0x20] sm:$0xf]
    %v774 = vld [vmem:[#allocation2 + $0x24] sm:$0xf]
    %v775 = vld [vmem:[#allocation2 + $0x28] sm:$0xf]
    %v776 = vld [vmem:[#allocation2 + $0x2c] sm:$0xf]
    %v777 = vunpack.c.l.bf16 %v765
    %v778 = vunpack.c.l.bf16 %v766
    %v779 = vunpack.c.l.bf16 %v767
    %v780 = vunpack.c.l.bf16 %v768
    %v781 = vunpack.c.l.bf16 %v769
    %v782 = vunpack.c.l.bf16 %v770
    %v783 = vunpack.c.l.bf16 %v771
    %v784 = vunpack.c.l.bf16 %v772
    %v785 = vunpack.c.l.bf16 %v773
    %v786 = vunpack.c.l.bf16 %v774
    %v787 = vunpack.c.l.bf16 %v775
    %v788 = vunpack.c.l.bf16 %v776
    %v789 = vadd.f32 %v753, %v777
    %v790 = vadd.f32 %v754, %v778
    %v791 = vadd.f32 %v755, %v779
    %v792 = vadd.f32 %v756, %v780
    %v793 = vadd.f32 %v757, %v781
    %v794 = vadd.f32 %v758, %v782
    %v795 = vadd.f32 %v759, %v783
    %v796 = vadd.f32 %v760, %v784
    %v797 = vadd.f32 %v761, %v785
    %v798 = vadd.f32 %v762, %v786
    %v799 = vadd.f32 %v763, %v787
    %v800 = vadd.f32 %v764, %v788
    %v801 = vstv %s87
    %vm802 = vcmp.gt.s32.totalorder %v801, 0
    %vm803 = vcmp.gt.s32.totalorder %v801, 1
    %vm804 = vcmp.gt.s32.totalorder %v801, 2
    %vm805 = vcmp.gt.s32.totalorder %v801, 3
    %vm806 = vcmp.gt.s32.totalorder %v801, 4
    %vm807 = vcmp.gt.s32.totalorder %v801, 5
    %vm808 = vcmp.gt.s32.totalorder %v801, 6
    %vm809 = vcmp.gt.s32.totalorder %v801, 7
    %vm810 = vcmp.gt.s32.totalorder %v801, 8
    %vm811 = vcmp.gt.s32.totalorder %v801, 9
    %vm812 = vcmp.gt.s32.totalorder %v801, 10
    %vm813 = vcmp.gt.s32.totalorder %v801, 11
    %v814 = vsel %vm802, 1, 0
    %v815 = vsel %vm803, 1, 0
    %v816 = vsel %vm804, 1, 0
    %v817 = vsel %vm805, 1, 0
    %v818 = vsel %vm806, 1, 0
    %v819 = vsel %vm807, 1, 0
    %v820 = vsel %vm808, 1, 0
    %v821 = vsel %vm809, 1, 0
    %v822 = vsel %vm810, 1, 0
    %v823 = vsel %vm811, 1, 0
    %v824 = vsel %vm812, 1, 0
    %v825 = vsel %vm813, 1, 0
    %vm826 = vcmp.eq.s32.totalorder %v814, 1
    %vm827 = vcmp.eq.s32.totalorder %v815, 1
    %vm828 = vcmp.eq.s32.totalorder %v816, 1
    %vm829 = vcmp.eq.s32.totalorder %v817, 1
    %vm830 = vcmp.eq.s32.totalorder %v818, 1
    %vm831 = vcmp.eq.s32.totalorder %v819, 1
    %vm832 = vcmp.eq.s32.totalorder %v820, 1
    %vm833 = vcmp.eq.s32.totalorder %v821, 1
    %vm834 = vcmp.eq.s32.totalorder %v822, 1
    %vm835 = vcmp.eq.s32.totalorder %v823, 1
    %vm836 = vcmp.eq.s32.totalorder %v824, 1
    %vm837 = vcmp.eq.s32.totalorder %v825, 1
    %v838 = vsel %vm826, %v789, 0.0
    %v839 = vsel %vm827, %v790, 0.0
    %v840 = vsel %vm828, %v791, 0.0
    %v841 = vsel %vm829, %v792, 0.0
    %v842 = vsel %vm830, %v793, 0.0
    %v843 = vsel %vm831, %v794, 0.0
    %v844 = vsel %vm832, %v795, 0.0
    %v845 = vsel %vm833, %v796, 0.0
    %v846 = vsel %vm834, %v797, 0.0
    %v847 = vsel %vm835, %v798, 0.0
    %v848 = vsel %vm836, %v799, 0.0
    %v849 = vsel %vm837, %v800, 0.0
    %v850 = vpack.c.bf16 %v838, %v838
    %v851 = vpack.c.bf16 %v839, %v839
    %v852 = vpack.c.bf16 %v840, %v840
    %v853 = vpack.c.bf16 %v841, %v841
    %v854 = vpack.c.bf16 %v842, %v842
    %v855 = vpack.c.bf16 %v843, %v843
    %v856 = vpack.c.bf16 %v844, %v844
    %v857 = vpack.c.bf16 %v845, %v845
    %v858 = vpack.c.bf16 %v846, %v846
    %v859 = vpack.c.bf16 %v847, %v847
    %v860 = vpack.c.bf16 %v848, %v848
    %v861 = vpack.c.bf16 %v849, %v849
    %862 = vst [vmem:[#allocation12] sm:$0xf] %v850
    %863 = vst [vmem:[#allocation12 + $0x4] sm:$0xf] %v851
    %864 = vst [vmem:[#allocation12 + $0x8] sm:$0xf] %v852
    %865 = vst [vmem:[#allocation12 + $0xc] sm:$0xf] %v853
    %866 = vst [vmem:[#allocation12 + $0x10] sm:$0xf] %v854
    %867 = vst [vmem:[#allocation12 + $0x14] sm:$0xf] %v855
    %868 = vst [vmem:[#allocation12 + $0x18] sm:$0xf] %v856
    %869 = vst [vmem:[#allocation12 + $0x1c] sm:$0xf] %v857
    %870 = vst [vmem:[#allocation12 + $0x20] sm:$0xf] %v858
    %871 = vst [vmem:[#allocation12 + $0x24] sm:$0xf] %v859
    %872 = vst [vmem:[#allocation12 + $0x28] sm:$0xf] %v860
    %873 = vst [vmem:[#allocation12 + $0x2c] sm:$0xf] %v861
    %874 = vst [vmem:[#allocation13] sm:$0xff] %v95
    %s875 = scalar_lea.vmem [#allocation13], 8
    %876 = vst [vmem:[%s875] sm:$0xff] %v97
    %877 = vst [vmem:[#allocation15] sm:$0xff] %v96
    %s878 = scalar_lea.vmem [#allocation15], 8
    %879 = vst [vmem:[%s878] sm:$0xff] %v98
    // Predicated region
    $region49: #{tpu_custom_call.1} parent=1 // pred_check
      _
    $region50: #{tpu_custom_call.1} parent=1 // pred_check_branch
      %881 = sbr.rel (0) target = $region52
    $region51: #{tpu_custom_call.1} parent=1 // pred_region
      %s883 = ssub.s32 768, 768
      %884 = vsyncadd [#allocation6], %s883
      %s885 = sshll.u32 [#allocation12], 4
      %s886 = int_to_ptr.vmem [resolvable:$true] %s885
      %891 = dma.vmem_to_hbm [thread:$0]  %s886, 768, %s6, [#allocation6], 64, 64, 4
    $region52: #{tpu_custom_call.1} parent=1 // pred_fallthru
      _
    // Predicated region
    $region53: #{tpu_custom_call.1} parent=1 // pred_check
      _
    $region54: #{tpu_custom_call.1} parent=1 // pred_check_branch
      %893 = sbr.rel (0) target = $region56
    $region55: #{tpu_custom_call.1} parent=1 // pred_region
      %s895 = ssub.s32 256, 256
      %896 = vsyncadd [#allocation14], %s895
      %s897 = sshll.u32 [#allocation13], 4
      %s898 = int_to_ptr.vmem [resolvable:$true] %s897
      %903 = dma.vmem_to_hbm [thread:$0]  %s898, 256, %s7, [#allocation14], 128, 128, 8
    $region56: #{tpu_custom_call.1} parent=1 // pred_fallthru
      _
    // Predicated region
    $region57: #{tpu_custom_call.1} parent=1 // pred_check
      _
    $region58: #{tpu_custom_call.1} parent=1 // pred_check_branch
      %905 = sbr.rel (0) target = $region60
    $region59: #{tpu_custom_call.1} parent=1 // pred_region
      %s907 = ssub.s32 256, 256
      %908 = vsyncadd [#allocation14], %s907
      %s909 = sshll.u32 [#allocation15], 4
      %s910 = int_to_ptr.vmem [resolvable:$true] %s909
      %915 = dma.vmem_to_hbm [thread:$0]  %s910, 256, %s8, [#allocation14], 128, 128, 8
    $region60: #{tpu_custom_call.1} parent=1 // pred_fallthru
      _
    // Predicated region
    $region61: #{tpu_custom_call.1} parent=1 // pred_check
      _
    $region62: #{tpu_custom_call.1} parent=1 // pred_check_branch
      %917 = sbr.rel (0) target = $region64
    $region63: #{tpu_custom_call.1} parent=1 // pred_region
      %918 = dma.done [#allocation6], 768
    $region64: #{tpu_custom_call.1} parent=1 // pred_fallthru
      _
    // Predicated region
    $region65: #{tpu_custom_call.1} parent=1 // pred_check
      _
    $region66: #{tpu_custom_call.1} parent=1 // pred_check_branch
      %920 = sbr.rel (0) target = $region68
    $region67: #{tpu_custom_call.1} parent=1 // pred_region
      %921 = dma.done [#allocation14], 256
    $region68: #{tpu_custom_call.1} parent=1 // pred_fallthru
      _
    // Predicated region
    $region69: #{tpu_custom_call.1} parent=1 // pred_check
      _
    $region70: #{tpu_custom_call.1} parent=1 // pred_check_branch
      %923 = sbr.rel (0) target = $region72
    $region71: #{tpu_custom_call.1} parent=1 // pred_region
      %924 = dma.done [#allocation14], 256
    $region72: #{tpu_custom_call.1} parent=1 // pred_fallthru
      _
    %925 = vsyncpa [#allocation5], 1
    %926 = vsyncpa [#allocation8], 1
    %927 = vsyncpa [#allocation11], 1
    %928 = vsyncpa [#allocation6], 1
    %929 = vsyncpa [#allocation14], 1

</llo_original>
